<compile_context>
chip_gen: v6e
topology: v6e:2x2x1
jax: 0.10.0
libtpu: 0.0.40
codegen_flags: <defaults>
</compile_context>

<pallas_src>
import functools

import jax
import jax.numpy as jnp
from jax.experimental import pallas as pl
from jax.experimental.pallas import tpu as pltpu


_MASK_VALUE = -1e30  # for garbage tail columns: never wins the max, exp -> 0


def _round_up(x, m):
    return ((x + m - 1) // m) * m


def _vmem_capacity_bytes():
    """Physical VMEM of the current generation; conservative fallback."""
    try:
        return int(pltpu.get_tpu_info().vmem_capacity_bytes)
    except Exception:
        return 64 << 20  # v7x-safe; v5e/v6e have 128 MiB


# ---------------------------------------------------------------------------
# Kernels
# ---------------------------------------------------------------------------

def _fused_small_vocab_kernel(x_ref, w_ref, b_ref, o_ref, *, v_total, mask_tail):
    """Single-trip path (whole vocab in one tile): matmul + full log_softmax."""
    logits = jnp.dot(x_ref[...], w_ref[...],
                     preferred_element_type=jnp.float32) + b_ref[...]
    if mask_tail:  # static: only emitted when the vocab tile overhangs V
        col = jax.lax.broadcasted_iota(jnp.int32, logits.shape, 1)
        logits = jnp.where(col < v_total, logits, _MASK_VALUE)
    m = jnp.max(logits, axis=-1, keepdims=True)
    l = jnp.sum(jnp.exp(logits - m), axis=-1, keepdims=True)
    o_ref[...] = (logits - (m + jnp.log(l))).astype(o_ref.dtype)


def _logits_lse_kernel(x_ref, w_ref, b_ref, logits_ref, lse_ref, m_sc, l_sc,
                       *, v_total, tv, mask_tail):
    """Pass 1: stream vocab tiles ONCE.

    Writes un-normalized logits (f32) to HBM, keeps an online logsumexp
    (running max m, rescaled sum l) in VMEM scratch, and emits the per-row
    LSE on the last vocab step.  grid = (row_tiles, vocab_tiles).
    """
    k = pl.program_id(1)

    @pl.when(k == 0)
    def _init():
        m_sc[...] = jnp.full_like(m_sc, -jnp.inf)
        l_sc[...] = jnp.zeros_like(l_sc)

    logits = jnp.dot(x_ref[...], w_ref[...],
                     preferred_element_type=jnp.float32) + b_ref[...]
    if mask_tail:  # static: mask garbage columns of the ragged last vocab tile
        col = k * tv + jax.lax.broadcasted_iota(jnp.int32, logits.shape, 1)
        logits = jnp.where(col < v_total, logits, _MASK_VALUE)

    m_prev = m_sc[...]
    m_new = jnp.maximum(m_prev, jnp.max(logits, axis=-1, keepdims=True))
    alpha = jnp.exp(m_prev - m_new)
    l_sc[...] = alpha * l_sc[...] + jnp.sum(jnp.exp(logits - m_new),
                                            axis=-1, keepdims=True)
    m_sc[...] = m_new

    logits_ref[...] = logits  # un-normalized logits, written exactly once

    @pl.when(k == pl.num_programs(1) - 1)
    def _emit_lse():
        lse_ref[...] = m_sc[...] + jnp.log(l_sc[...])


def _normalize_kernel(logits_ref, lse_ref, o_ref):
    """Pass 2: trivial VPU-only normalization (no matmul recompute)."""
    o_ref[...] = (logits_ref[...] - lse_ref[...]).astype(o_ref.dtype)


# ---------------------------------------------------------------------------
# Wrapper
# ---------------------------------------------------------------------------

def projection_layer(x, w, b, *, tm=None, tv=None,
                     compute_dtype=jnp.bfloat16, out_dtype=None):
    """log_softmax(x @ w + b, axis=-1).

    x: (B, S, D); w: (D, V) (= PyTorch Linear weight transposed); b: (V,).
    Returns (B, S, V) log-probabilities in `out_dtype` (default x.dtype).
    In production, keep `w` stored in `compute_dtype` to avoid a per-call cast.
    """
    B, S, D = x.shape
    Dw, V = w.shape
    assert Dw == D and b.shape == (V,)
    out_dtype = out_dtype or x.dtype
    M = B * S

    cb = jnp.dtype(compute_dtype).itemsize
    row_align = max(8, 32 // max(cb, 1))  # f32 -> 8, bf16 -> 16, int8 -> 32

    vmem_cap = _vmem_capacity_bytes()
    budget = max(24 << 20, (vmem_cap * 3) // 4)  # headroom for compiler scratch

    # Generation-aware defaults (roofline balance once the recompute is gone):
    # ~768 rows on 128 MiB parts (v5e/v6e), ~448 on 64 MiB v7x; tv=1024 to cut
    # grid-step overhead and make weight DMAs large.
    if tm is None:
        tm = 768 if vmem_cap >= (96 << 20) else 448
    if tv is None:
        tv = 1024

    tm_eff = max(row_align, min(_round_up(M, row_align),
                                (tm // row_align) * row_align))
    tv_eff = max(128, min(_round_up(V, 128), (tv // 128) * 128))

    def est_vmem(tm_e, tv_e):
        return (2 * (tm_e * D * cb          # x tile (double-buffered)
                     + D * tv_e * cb        # weight tile
                     + 8 * tv_e * 4         # bias tile (sublane-padded)
                     + tm_e * tv_e * 4      # logits / output tile
                     + tm_e * 128 * 4)      # lse tile (lane-padded)
                + 2 * tm_e * 128 * 4)       # m/l scratch

    # Shrink-to-fit: prefer shrinking tv (keeps FLOPs-per-weight-byte = tm).
    while est_vmem(tm_eff, tv_eff) > budget:
        if tv_eff > 512:
            tv_eff = max(512, ((tv_eff // 2) // 128) * 128)
        elif tm_eff > 2 * row_align:
            tm_eff = max(row_align, ((tm_eff // 2) // row_align) * row_align)
        else:
            break

    n_m = pl.cdiv(M, tm_eff)
    n_v = pl.cdiv(V, tv_eff)
    mask_tail = (V % tv_eff) != 0

    vmem_limit = int(min(budget,
                         max(16 << 20,
                             est_vmem(tm_eff, tv_eff) * 3 // 2 + (1 << 20))))

    # No padding, no output slicing: ragged tails handled in-kernel / by Pallas.
    x2 = x.reshape(M, D)
    if x2.dtype != compute_dtype:
        x2 = x2.astype(compute_dtype)
    w2 = w if w.dtype == compute_dtype else w.astype(compute_dtype)
    b2 = b.astype(jnp.float32).reshape(1, V)

    if n_v == 1:
        # Whole vocab fits one tile: single fused trip, no intermediate.
        kernel = functools.partial(_fused_small_vocab_kernel,
                                   v_total=V, mask_tail=mask_tail)
        out = pl.pallas_call(
            kernel,
            out_shape=jax.ShapeDtypeStruct((M, V), out_dtype),
            grid_spec=pltpu.PrefetchScalarGridSpec(
                num_scalar_prefetch=0,
                grid=(n_m,),
                in_specs=[
                    pl.BlockSpec((tm_eff, D), lambda i: (i, 0)),
                    pl.BlockSpec((D, tv_eff), lambda i: (0, 0)),
                    pl.BlockSpec((1, tv_eff), lambda i: (0, 0)),
                ],
                out_specs=pl.BlockSpec((tm_eff, tv_eff), lambda i: (i, 0)),
            ),
            compiler_params=pltpu.CompilerParams(
                dimension_semantics=("parallel",),
                vmem_limit_bytes=vmem_limit,
            ),
        )(x2, w2, b2)
        return out.reshape(B, S, V)

    # ---- Pass 1: logits + online LSE (one weight pass, one matmul pass) ----
    kern1 = functools.partial(_logits_lse_kernel,
                              v_total=V, tv=tv_eff, mask_tail=mask_tail)
    logits_u, lse = pl.pallas_call(
        kern1,
        out_shape=(jax.ShapeDtypeStruct((M, V), jnp.float32),
                   jax.ShapeDtypeStruct((M, 1), jnp.float32)),
        grid_spec=pltpu.PrefetchScalarGridSpec(
            num_scalar_prefetch=0,
            grid=(n_m, n_v),
            in_specs=[
                # x row tile: constant across k -> DMAed once per row tile.
                pl.BlockSpec((tm_eff, D), lambda i, k: (i, 0)),
                # weight vocab tile: streamed once, pipelined behind the matmul.
                pl.BlockSpec((D, tv_eff), lambda i, k: (0, k)),
                # bias vocab tile.
                pl.BlockSpec((1, tv_eff), lambda i, k: (0, k)),
            ],
            out_specs=[
                pl.BlockSpec((tm_eff, tv_eff), lambda i, k: (i, k)),
                pl.BlockSpec((tm_eff, 1), lambda i, k: (i, 0)),
            ],
            scratch_shapes=[
                pltpu.VMEM((tm_eff, 1), jnp.float32),  # running max m
                pltpu.VMEM((tm_eff, 1), jnp.float32),  # running sum l
            ],
        ),
        compiler_params=pltpu.CompilerParams(
            dimension_semantics=("parallel", "arbitrary"),
            vmem_limit_bytes=vmem_limit,
        ),
    )(x2, w2, b2)

    # ---- Pass 2: elementwise normalization (VPU only, memory bound) --------
    out = pl.pallas_call(
        _normalize_kernel,
        out_shape=jax.ShapeDtypeStruct((M, V), out_dtype),
        grid_spec=pltpu.PrefetchScalarGridSpec(
            num_scalar_prefetch=0,
            grid=(n_m, n_v),
            in_specs=[
                pl.BlockSpec((tm_eff, tv_eff), lambda i, k: (i, k)),
                pl.BlockSpec((tm_eff, 1), lambda i, k: (i, 0)),
            ],
            out_specs=pl.BlockSpec((tm_eff, tv_eff), lambda i, k: (i, k)),
        ),
        compiler_params=pltpu.CompilerParams(
            dimension_semantics=("parallel", "parallel"),
            vmem_limit_bytes=vmem_limit,
        ),
    )(logits_u, lse)
    return out.reshape(B, S, V)


# ---------------------------------------------------------------------------
# Self-test
# ---------------------------------------------------------------------------

if __name__ == "__main__":
    def make_inputs(B, S, D, V, key):
        kx, kw, kb = jax.random.split(key, 3)
        bound = 1.0 / (D ** 0.5)  # mirror nn.Linear's init
        w = jax.random.uniform(kw, (D, V), jnp.float32, -bound, bound)  # weight.T
        b = jax.random.uniform(kb, (V,), jnp.float32, -bound, bound)
        x = jax.random.normal(kx, (B, S, D), jnp.float32)
        return x, w, b

    # Case 1: spec-sized shapes, single-tile vocab (fused single-pass path),
    # f32 compute, tight check against the pure-JAX reference.
    B, S, D, V = 2, 8, 32, 128
    x, w, b = make_inputs(B, S, D, V, jax.random.PRNGKey(0))
    y = projection_layer(x, w, b, compute_dtype=jnp.float32)
    jax.block_until_ready(y)
    ref = jax.nn.log_softmax(x @ w + b, axis=-1)
    assert y.shape == (B, S, V)
    assert jnp.allclose(y, ref, atol=1e-5, rtol=1e-5), \
        float(jnp.max(jnp.abs(y - ref)))

    # Case 2: multi-tile vocab (two-pass path: logits+LSE, then normalize),
    # f32 compute, still a tight check.
    B2, S2, D2, V2 = 2, 8, 32, 384
    x2, w2, b2 = make_inputs(B2, S2, D2, V2, jax.random.PRNGKey(1))
    y2 = projection_layer(x2, w2, b2, tv=128, compute_dtype=jnp.float32)
    jax.block_until_ready(y2)
    ref2 = jax.nn.log_softmax(x2 @ w2 + b2, axis=-1)
    assert y2.shape == (B2, S2, V2)
    assert jnp.allclose(y2, ref2, atol=1e-4, rtol=1e-4), \
        float(jnp.max(jnp.abs(y2 - ref2)))

    # Case 3: ragged rows (M=10) and ragged vocab (V=200, tv=128 -> 2 tiles,
    # masked tail), bf16 MXU path.  Reference uses the same bf16-rounded inputs.
    B3, S3, D3, V3 = 2, 5, 32, 200
    x3, w3, b3 = make_inputs(B3, S3, D3, V3, jax.random.PRNGKey(2))
    y3 = projection_layer(x3, w3, b3, tv=128, compute_dtype=jnp.bfloat16)
    jax.block_until_ready(y3)
    xb = x3.astype(jnp.bfloat16).astype(jnp.float32)
    wb = w3.astype(jnp.bfloat16).astype(jnp.float32)
    ref3 = jax.nn.log_softmax(xb @ wb + b3, axis=-1)
    assert y3.shape == (B3, S3, V3)
    assert jnp.allclose(y3, ref3, atol=2e-3, rtol=2e-3), \
        float(jnp.max(jnp.abs(y3 - ref3)))

    print("KERNEL_OK")
</pallas_src>

<mosaic_0001>
module attributes {stable_mosaic.version = 11 : i64} {
  func.func @_fused_small_vocab_kernel(%arg0: i32, %arg1: memref<16x32xf32, #tpu.memory_space<vmem>>, %arg2: memref<32x128xf32, #tpu.memory_space<vmem>>, %arg3: memref<1x128xf32, #tpu.memory_space<vmem>>, %arg4: memref<16x128xf32, #tpu.memory_space<vmem>>) attributes {dimension_semantics = [#tpu.dimension_semantics<parallel>], iteration_bounds = array<i64: 1>, scalar_prefetch = 0 : i64, scratch_operands = 0 : i64, tpu.core_type = #tpu.core_type<tc>, window_params = [{transform_indices = @transform_0, window_bounds = array<i64: 16, 32>}, {pipeline_mode = #tpu.pipeline_mode<synchronous>, transform_indices = @transform_1, window_bounds = array<i64: 32, 128>}, {pipeline_mode = #tpu.pipeline_mode<synchronous>, transform_indices = @transform_2, window_bounds = array<i64: 1, 128>}, {transform_indices = @transform_3, window_bounds = array<i64: 16, 128>}]} {
    %c0 = arith.constant 0 : index
    %c0_0 = arith.constant 0 : index
    %0 = vector.load %arg1[%c0, %c0_0] : memref<16x32xf32, #tpu.memory_space<vmem>>, vector<16x32xf32>
    %c0_1 = arith.constant 0 : index
    %c0_2 = arith.constant 0 : index
    %1 = vector.load %arg2[%c0_1, %c0_2] : memref<32x128xf32, #tpu.memory_space<vmem>>, vector<32x128xf32>
    %cst = arith.constant dense<0.000000e+00> : vector<16x128xf32>
    %2 = tpu.matmul %0, %1, %cst {dimension_numbers = #tpu.dot_dimension_numbers<[1], [0], [0], [1], [0, 0, 1, 1], [], []>} : vector<16x32xf32>, vector<32x128xf32>, vector<16x128xf32> -> vector<16x128xf32>
    %c0_3 = arith.constant 0 : index
    %c0_4 = arith.constant 0 : index
    %3 = vector.load %arg3[%c0_3, %c0_4] : memref<1x128xf32, #tpu.memory_space<vmem>>, vector<1x128xf32>
    %4 = vector.broadcast %3 : vector<1x128xf32> to vector<16x128xf32>
    %5 = arith.addf %2, %4 : vector<16x128xf32>
    %cst_5 = arith.constant dense<0xFF800000> : vector<16xf32>
    %6 = vector.multi_reduction <maximumf>, %5, %cst_5 [1] : vector<16x128xf32> to vector<16xf32>
    %7 = vector.shape_cast %6 : vector<16xf32> to vector<16x1xf32>
    %8 = vector.broadcast %7 : vector<16x1xf32> to vector<16x128xf32>
    %9 = arith.subf %5, %8 : vector<16x128xf32>
    %10 = math.exp %9 : vector<16x128xf32>
    %cst_6 = arith.constant dense<0.000000e+00> : vector<16xf32>
    %11 = vector.multi_reduction <add>, %10, %cst_6 [1] : vector<16x128xf32> to vector<16xf32>
    %12 = vector.shape_cast %11 : vector<16xf32> to vector<16x1xf32>
    %13 = math.log %12 : vector<16x1xf32>
    %14 = arith.addf %7, %13 : vector<16x1xf32>
    %15 = vector.broadcast %14 : vector<16x1xf32> to vector<16x128xf32>
    %16 = arith.subf %5, %15 : vector<16x128xf32>
    %c0_7 = arith.constant 0 : index
    %c0_8 = arith.constant 0 : index
    %17 = vector.load %arg4[%c0_7, %c0_8] : memref<16x128xf32, #tpu.memory_space<vmem>>, vector<16x128xf32>
    tpu.vector_store %arg4[%c0_7, %c0_8], %16 {strides = array<i32>} : memref<16x128xf32, #tpu.memory_space<vmem>>, vector<16x128xf32>,
    return
  }
  func.func @transform_0(%arg0: i32) -> (i32, i32) {
    %c0_i32 = arith.constant 0 : i32
    %c0_i32_0 = arith.constant 0 : i32
    return %arg0, %c0_i32 : i32, i32
  }
  func.func @transform_1(%arg0: i32) -> (i32, i32) {
    %c0_i32 = arith.constant 0 : i32
    %c0_i32_0 = arith.constant 0 : i32
    %c0_i32_1 = arith.constant 0 : i32
    return %c0_i32, %c0_i32_0 : i32, i32
  }
  func.func @transform_2(%arg0: i32) -> (i32, i32) {
    %c0_i32 = arith.constant 0 : i32
    %c0_i32_0 = arith.constant 0 : i32
    %c0_i32_1 = arith.constant 0 : i32
    return %c0_i32, %c0_i32_0 : i32, i32
  }
  func.func @transform_3(%arg0: i32) -> (i32, i32) {
    %c0_i32 = arith.constant 0 : i32
    %c0_i32_0 = arith.constant 0 : i32
    return %arg0, %c0_i32 : i32, i32
  }
}

</mosaic_0001>

<llo_original>
// kernel: tpu_custom_call.1
$region0: #{tpu_custom_call.1}
  #allocation0 [shape = 'u32[]', space=smem, size = 0x4, offset = 0x4, fixed_abs, tag = 'smem constant byte address 0x4 - core index']
  #allocation1 [shape = 'u32[144,128]{1,0:T(1,128)}', space=vmem, size = 0x12000, scoped, tag = 'internal scratch']
  %s0 = inlined_call_operand.hbm [shape: f32[16,32], index: 0, kind: input, shape index: {}]
  %s1 = inlined_call_operand.hbm [shape: f32[32,128], index: 1, kind: input, shape index: {}]
  %s2 = inlined_call_operand.vmem [shape: f32[1,128], index: 2, kind: input, shape index: {}]
  %s3 = inlined_call_operand.hbm [shape: f32[16,128], index: 3, kind: output, shape index: {}]
  %s4 = sld [smem:[#allocation0]]
  $region30: #{tpu_custom_call.1} parent=0
    _
  %s6 = ssub.s32 1, %s4
  %s7 = scalar_select 0, %s6, %s4
  $region1: #{tpu_custom_call.1} parent=0
    #allocation2 [shape = 'u8[8192]{0}', space=vmem, size = 0x2000, scoped, tag = 'input window, operand 0, single buffered']
    #allocation3 [shape = 's32[1]{0}', space=sflag, size = 0x4, scoped, tag = 'scoped memory for tpu_custom_call.1']
    #allocation4 [shape = 's32[1]{0}', space=sflag, size = 0x4, scoped, tag = 'scoped memory for tpu_custom_call.1']
    #allocation5 [shape = 'u8[16384]{0}', space=vmem, size = 0x4000, scoped, tag = 'input window, operand 1, single buffered']
    #allocation6 [shape = 's32[1]{0}', space=sflag, size = 0x4, scoped, tag = 'scoped memory for tpu_custom_call.1']
    #allocation7 [shape = 'u8[8192]{0}', space=vmem, size = 0x2000, scoped, tag = 'output window, operand 0, single buffered']
    %8 = vsyncpa [#allocation3], 0
    %9 = vsyncpa [#allocation6], 0
    %10 = vsyncpa [#allocation4], 0
    // Predicated region
    $region2: #{tpu_custom_call.1} parent=1 // pred_check
      _
    $region3: #{tpu_custom_call.1} parent=1 // pred_check_branch
      %12 = sbr.rel (0) target = $region5
    $region4: #{tpu_custom_call.1} parent=1 // pred_region
      %s14 = ssub.s32 256, 256
      %15 = vsyncadd [#allocation3], %s14
      %s16 = sshll.u32 [#allocation2], 4
      %s17 = int_to_ptr.vmem [resolvable:$true] %s16
      %22 = dma.hbm_to_vmem [thread:$0]  %s0, 256, %s17, [#allocation3], 128, 128, 8
    $region5: #{tpu_custom_call.1} parent=1 // pred_fallthru
      _
    // Predicated region
    $region6: #{tpu_custom_call.1} parent=1 // pred_check
      _
    $region7: #{tpu_custom_call.1} parent=1 // pred_check_branch
      %24 = sbr.rel (0) target = $region9
    $region8: #{tpu_custom_call.1} parent=1 // pred_region
      %s26 = ssub.s32 512, 512
      %27 = vsyncadd [#allocation6], %s26
      %s28 = sshll.u32 [#allocation5], 4
      %s29 = int_to_ptr.vmem [resolvable:$true] %s28
      %34 = dma.hbm_to_vmem [thread:$0]  %s1, 512, %s29, [#allocation6], 128, 128, 8
    $region9: #{tpu_custom_call.1} parent=1 // pred_fallthru
      _
    // Predicated region
    $region10: #{tpu_custom_call.1} parent=1 // pred_check
      _
    $region11: #{tpu_custom_call.1} parent=1 // pred_check_branch
      %36 = sbr.rel (0) target = $region13
    $region12: #{tpu_custom_call.1} parent=1 // pred_region
      _
    $region13: #{tpu_custom_call.1} parent=1 // pred_fallthru
      _
    // Predicated region
    $region14: #{tpu_custom_call.1} parent=1 // pred_check
      _
    $region15: #{tpu_custom_call.1} parent=1 // pred_check_branch
      %38 = sbr.rel (0) target = $region17
    $region16: #{tpu_custom_call.1} parent=1 // pred_region
      %39 = dma.done [#allocation3], 256
    $region17: #{tpu_custom_call.1} parent=1 // pred_fallthru
      _
    // Predicated region
    $region18: #{tpu_custom_call.1} parent=1 // pred_check
      _
    $region19: #{tpu_custom_call.1} parent=1 // pred_check_branch
      %41 = sbr.rel (0) target = $region21
    $region20: #{tpu_custom_call.1} parent=1 // pred_region
      %42 = dma.done [#allocation6], 512
    $region21: #{tpu_custom_call.1} parent=1 // pred_fallthru
      _
    %v43 = vld [vmem:[#allocation2] sm:$0xff]
    %v44 = vld [vmem:[#allocation2 + $0x8] sm:$0xff]
    %v45 = vld [vmem:[#allocation5] sm:$0xff]
    %v46 = vld [vmem:[#allocation5 + $0x8] sm:$0xff]
    %v47 = vld [vmem:[#allocation5 + $0x10] sm:$0xff]
    %v48 = vld [vmem:[#allocation5 + $0x18] sm:$0xff]
    %v49 = vld [vmem:[%s2] sm:$0x1]
    %v51 = vlaneseq
    %v52 = vshrl.u32 %v51, 7
    %v53 = vsub.s32 0, %v52
    %v54 = vrot.slane %v49, %v53
    %vm56 = vcmask 261120
    %v58 = vsel %vm56, %v43, 0
    %v61 = vsel %vm56, %v44, 0
    %63 = vmatprep.subr.mxu0 0.0
    %64 = vmatpush1.msra.mxu0 0.0
    %65 = vmatprep.subr.mxu0 0.0
    %66 = vmatpush1.msra.mxu0 0.0
    %67 = vmatprep.subr.mxu0 0.0
    %68 = vmatpush1.msra.mxu0 0.0
    %69 = vmatprep.subr.mxu0 0.0
    %70 = vmatpush1.msra.mxu0 0.0
    %71 = vmatprep.subr.mxu0 0.0
    %72 = vmatpush1.msra.mxu0 0.0
    %73 = vmatprep.subr.mxu0 0.0
    %74 = vmatpush1.msra.mxu0 0.0
    %75 = vmatprep.subr.mxu0 0.0
    %76 = vmatpush1.msra.mxu0 0.0
    %77 = vmatprep.subr.mxu0 0.0
    %78 = vmatpush1.msra.mxu0 0.0
    %79 = vmatprep.subr.mxu0 0.0
    %80 = vmatpush1.msra.mxu0 0.0
    %81 = vmatprep.subr.mxu0 0.0
    %82 = vmatpush1.msra.mxu0 0.0
    %83 = vmatprep.subr.mxu0 0.0
    %84 = vmatpush1.msra.mxu0 0.0
    %85 = vmatprep.subr.mxu0 0.0
    %86 = vmatpush1.msra.mxu0 0.0
    %87 = vmatprep.subr.mxu0 0.0
    %88 = vmatpush1.msra.mxu0 %v48
    %89 = vmatprep.subr.mxu0 0.0
    %90 = vmatpush1.msra.mxu0 %v47
    %91 = vmatprep.subr.mxu0 0.0
    %92 = vmatpush1.msra.mxu0 %v46
    %93 = vmatprep.subr.mxu0 0.0
    %94 = vmatpush1.msra.mxu0 %v45
    %95 = vmatprep.subr.mxu0 0.0
    %96 = vmatpush2.msra.mxu0 0.0
    %97 = vmatprep.subr.mxu0 0.0
    %98 = vmatpush2.msra.mxu0 0.0
    %99 = vmatprep.subr.mxu0 0.0
    %100 = vmatpush2.msra.mxu0 0.0
    %101 = vmatprep.subr.mxu0 0.0
    %102 = vmatpush2.msra.mxu0 0.0
    %103 = vmatprep.subr.mxu0 0.0
    %104 = vmatpush2.msra.mxu0 0.0
    %105 = vmatprep.subr.mxu0 0.0
    %106 = vmatpush2.msra.mxu0 0.0
    %107 = vmatprep.subr.mxu0 0.0
    %108 = vmatpush2.msra.mxu0 0.0
    %109 = vmatprep.subr.mxu0 0.0
    %110 = vmatpush2.msra.mxu0 0.0
    %111 = vmatprep.subr.mxu0 0.0
    %112 = vmatpush2.msra.mxu0 0.0
    %113 = vmatprep.subr.mxu0 0.0
    %114 = vmatpush2.msra.mxu0 0.0
    %115 = vmatprep.subr.mxu0 0.0
    %116 = vmatpush2.msra.mxu0 0.0
    %117 = vmatprep.subr.mxu0 0.0
    %118 = vmatpush2.msra.mxu0 0.0
    %119 = vmatprep.subr.mxu0 0.0
    %120 = vmatpush2.msra.mxu0 0.0
    %121 = vmatprep.subr.mxu0 0.0
    %122 = vmatpush2.msra.mxu0 0.0
    %123 = vmatprep.subr.mxu0 0.0
    %124 = vmatpush2.msra.mxu0 0.0
    %125 = vmatprep.subr.mxu0 0.0
    %126 = vmatpush2.msra.mxu0 0.0
    %127 = vmatprep.mubr.f32.mxu0 0.0
    %128 = vmatmul.mubr.f32.gmra.mxu0 %v58
    %v129 = vpop.f32.mrf.mxu0
    %v130 = vadd.f32 %v54, %v129
    %v131 = vpop.f32.mrf.mxu0
    %132 = vmatprep.mubr.f32.mxu0 0.0
    %133 = vmatmul.mubr.f32.gmra.mxu0 %v61
    %v134 = vpop.f32.mrf.mxu0
    %v135 = vadd.f32 %v54, %v134
    %v136 = vpop.f32.mrf.mxu0
    %137 = vdwg.mxu0
    %138 = vmax.xlane.f32.xlu0 %v130
    %v139 = vpop.xlane.xlu0 %138
    %140 = vmax.xlane.f32.xlu0 %v135
    %v141 = vpop.xlane.xlu0 %140
    %v142 = vsub.f32 %v130, %v139
    %v143 = vsub.f32 %v135, %v141
    %v144 = vmul.f32 %v142, 1.442695
    %v145 = vpow.pop %v144
    %v146 = vmul.f32 %v143, 1.442695
    %v147 = vpow.pop %v146
    %148 = vadd.xlane.f32.xlu0 %v145
    %v149 = vpop.xlane.xlu0 %148
    %150 = vadd.xlane.f32.xlu0 %v147
    %v151 = vpop.xlane.xlu0 %150
    %v152 = vlog2.pop %v149
    %v153 = vmul.f32 %v152, 0.6931472
    %v154 = vlog2.pop %v151
    %v155 = vmul.f32 %v154, 0.6931472
    %v156 = vadd.f32 %v139, %v153
    %v157 = vadd.f32 %v141, %v155
    %v158 = vsub.f32 %v130, %v156
    %v159 = vsub.f32 %v135, %v157
    %160 = vst [vmem:[#allocation7] sm:$0xff] %v158
    %161 = vst [vmem:[#allocation7 + $0x8] sm:$0xff] %v159
    // Predicated region
    $region22: #{tpu_custom_call.1} parent=1 // pred_check
      _
    $region23: #{tpu_custom_call.1} parent=1 // pred_check_branch
      %163 = sbr.rel (0) target = $region25
    $region24: #{tpu_custom_call.1} parent=1 // pred_region
      %s165 = ssub.s32 256, 256
      %166 = vsyncadd [#allocation4], %s165
      %s167 = sshll.u32 [#allocation7], 4
      %s168 = int_to_ptr.vmem [resolvable:$true] %s167
      %173 = dma.vmem_to_hbm [thread:$0]  %s168, 256, %s3, [#allocation4], 128, 128, 8
    $region25: #{tpu_custom_call.1} parent=1 // pred_fallthru
      _
    // Predicated region
    $region26: #{tpu_custom_call.1} parent=1 // pred_check
      _
    $region27: #{tpu_custom_call.1} parent=1 // pred_check_branch
      %175 = sbr.rel (0) target = $region29
    $region28: #{tpu_custom_call.1} parent=1 // pred_region
      %176 = dma.done [#allocation4], 256
    $region29: #{tpu_custom_call.1} parent=1 // pred_fallthru
      _
    %177 = vsyncpa [#allocation3], 1
    %178 = vsyncpa [#allocation6], 1
    %179 = vsyncpa [#allocation4], 1

</llo_original>
